<compile_context>
chip_gen: v7x
topology: tpu7x:2x2x1
jax: 0.10.0
libtpu: 0.0.40
codegen_flags: <defaults>
</compile_context>

<pallas_src>
import math
import jax
import jax.numpy as jnp
from jax.experimental import pallas as pl
from jax.experimental.pallas import tpu as pltpu

N_NEURONS = 50          # logical hidden width of the PyTorch module
PAD_NEURONS = 56        # padded hidden width used inside the kernel (mult. of 8)
DROP = 0.0              # dropout prob is 0.0 in the reference -> identity


def _round_up(n, m):
    return ((n + m - 1) // m) * m


def _cdiv(a, b):
    return (a + b - 1) // b


def _vmem_budget_bytes():
    """Scoped-VMEM budget: ~3/4 of physical, capped at 96 MiB.
    Falls back to a v7x-safe 64 MiB physical assumption."""
    try:
        cap = int(getattr(pltpu.get_tpu_info(), "vmem_capacity_bytes"))
    except Exception:
        cap = 64 * 1024 * 1024
    return min(96 * 1024 * 1024, (3 * cap) // 4)


def discriminator_kernel(x_ref, w1_ref, b1_ref, w2_ref, b2_ref, w3_ref, b3_ref,
                         o_ref):
    # x tile: (D, tb), feature-major (batch on lanes). Weights are tiny and
    # VMEM-resident across all grid steps.
    xT = x_ref[...]                                              # (D, tb)

    # fc1: (56, D) @ (D, tb) on the MXU, canonical orientation.
    z1 = jnp.dot(w1_ref[...], xT, preferred_element_type=jnp.float32)
    h1 = jnp.tanh(z1 + b1_ref[...])                              # (56, tb)
    # dropout(p=0.0) == identity

    # fc2: (56, 56) @ (56, tb)
    z2 = jnp.dot(w2_ref[...], h1, preferred_element_type=jnp.float32)
    h2 = jnp.tanh(z2 + b2_ref[...])                              # (56, tb)
    # dropout(p=0.0) == identity

    # fc3 (out_features == 1): VPU multiply + sublane (XLU) reduction keeps
    # the result lane-dense as a (1, tb) row instead of a masked (tb, 1)
    # column store.
    out = jnp.sum(h2 * w3_ref[...], axis=0, keepdims=True) + b3_ref[...]
    o_ref[...] = out.astype(o_ref.dtype)                         # (1, tb)


def discriminator_forward(x, padded_params, *, tile_batch=8192):
    """x: (B, d_input_dim) float32; padded_params from prepare_params().
    tile_batch is a per-call tunable (rows per grid step)."""
    w1p, b1p, w2p, b2p, w3p, b3p = padded_params
    x = x.astype(jnp.float32)
    B, D = x.shape

    vmem_budget = _vmem_budget_bytes()

    # Conservative per-batch-row VMEM footprint (bytes): double-buffered
    # (D, tb) x block, double-buffered (1, tb) output, ~4 live (56, tb) f32
    # intermediates, plus slack.
    per_row = 4 * (2 * D + 2 + 4 * PAD_NEURONS + 8)
    tb_vmem_max = max(128, (vmem_budget // per_row) // 128 * 128)

    # Pad batch only to a multiple of 128 (lane width); pick the tile from
    # the requested tile_batch, the VMEM cap, and the padded batch itself.
    b128 = _round_up(B, 128)
    tb = max(128, min(_round_up(tile_batch, 128), b128, tb_vmem_max))
    # Keep >= 2 grid steps when the batch allows it so the "parallel" batch
    # axis can shard across both v7x TensorCores (no-op / negligible cost on
    # single-TC v5e/v6e).
    if b128 >= 256 and _cdiv(b128, tb) < 2:
        tb = _round_up(_cdiv(b128, 2), 128)
    num_tiles = _cdiv(b128, tb)
    b_pad = num_tiles * tb

    # Feed x pre-transposed: (D, b_pad), lane-dense along the batch.
    xT = x.T                                                     # (D, B)
    if b_pad != B:
        xT = jnp.pad(xT, ((0, 0), (0, b_pad - B)))

    def full(a):
        # Whole array as one block, resident across all grid steps.
        return pl.BlockSpec(a.shape, lambda i: (0,) * a.ndim)

    cost = pl.CostEstimate(
        flops=2 * b_pad * (PAD_NEURONS * D + PAD_NEURONS * PAD_NEURONS
                           + PAD_NEURONS),
        transcendentals=2 * PAD_NEURONS * b_pad,
        bytes_accessed=b_pad * (D + 1) * 4
        + 4 * (w1p.size + b1p.size + w2p.size + b2p.size + w3p.size + b3p.size),
    )

    out = pl.pallas_call(
        discriminator_kernel,
        out_shape=jax.ShapeDtypeStruct((1, b_pad), jnp.float32),
        grid=(num_tiles,),
        in_specs=[
            pl.BlockSpec((D, tb), lambda i: (0, i)),   # x: new batch tile / step
            full(w1p), full(b1p), full(w2p), full(b2p), full(w3p), full(b3p),
        ],
        # Lane-dense output: one (1, tb) row per tile into a (1, b_pad) slab.
        out_specs=pl.BlockSpec((1, tb), lambda i: (0, i)),
        compiler_params=pltpu.CompilerParams(
            dimension_semantics=("parallel",),
            vmem_limit_bytes=vmem_budget,
        ),
        cost_estimate=cost,
    )(xT, w1p, b1p, w2p, b2p, w3p, b3p)

    # (1, b_pad) -> (B, 1), dropping padded columns.
    return out[0, :B].reshape(B, 1)


def init_params(key, d_input_dim, n_neurons=N_NEURONS):
    """PyTorch nn.Linear-style params: weight (out, in), bias (out,),
    init U(-k, k) with k = 1/sqrt(fan_in)."""
    keys = jax.random.split(key, 6)

    def lin(kw, kb, fan_in, fan_out):
        bound = 1.0 / math.sqrt(fan_in)
        w = jax.random.uniform(kw, (fan_out, fan_in), jnp.float32, -bound, bound)
        b = jax.random.uniform(kb, (fan_out,), jnp.float32, -bound, bound)
        return w, b

    w1, b1 = lin(keys[0], keys[1], d_input_dim, n_neurons)
    w2, b2 = lin(keys[2], keys[3], n_neurons, n_neurons)
    w3, b3 = lin(keys[4], keys[5], n_neurons, 1)
    return (w1, b1, w2, b2, w3, b3)


def prepare_params(params, n_pad=PAD_NEURONS):
    """Zero-pad the 50-wide hidden layer to 56 and lay params out for the
    kernel: weights (out_pad, in), biases as (out_pad, 1) columns, fc3 weight
    as a (56, 1) column, fc3 bias as (1, 1).  Padded rows/entries are zero so
    padded hidden units are exactly 0 through tanh and contribute nothing."""
    w1, b1, w2, b2, w3, b3 = params
    n = N_NEURONS
    d_in = w1.shape[1]
    w1p = jnp.zeros((n_pad, d_in), jnp.float32).at[:n, :].set(w1)
    b1p = jnp.zeros((n_pad, 1), jnp.float32).at[:n, 0].set(b1)
    w2p = jnp.zeros((n_pad, n_pad), jnp.float32).at[:n, :n].set(w2)
    b2p = jnp.zeros((n_pad, 1), jnp.float32).at[:n, 0].set(b2)
    w3p = jnp.zeros((n_pad, 1), jnp.float32).at[:n, 0].set(w3[0])
    b3p = jnp.reshape(b3, (1, 1)).astype(jnp.float32)
    return (w1p, b1p, w2p, b2p, w3p, b3p)


def reference_forward(x, params):
    w1, b1, w2, b2, w3, b3 = params
    hp = jax.lax.Precision.HIGHEST
    h1 = jnp.tanh(jnp.dot(x, w1.T, precision=hp) + b1)
    h2 = jnp.tanh(jnp.dot(h1, w2.T, precision=hp) + b2)
    return jnp.dot(h2, w3.T, precision=hp) + b3


if __name__ == "__main__":
    key = jax.random.PRNGKey(0)
    k_x, k_p, k_x2, k_x3 = jax.random.split(key, 4)

    d_input_dim = 16
    params = init_params(k_p, d_input_dim)
    padded = prepare_params(params)

    # Small batch: single 128-wide tile.
    batch = 8
    x = jax.random.normal(k_x, (batch, d_input_dim), dtype=jnp.float32)
    out = jax.block_until_ready(discriminator_forward(x, padded))
    ref = reference_forward(x, params)
    assert out.shape == (batch, 1)
    assert jnp.allclose(out, ref, atol=1e-4, rtol=1e-4)

    # Multi-tile path with an explicit small tile (exercises the parallel
    # batch grid, batch padding, and the lane-dense (1, b_pad) output slab).
    batch2 = 300
    x2 = jax.random.normal(k_x2, (batch2, d_input_dim), dtype=jnp.float32)
    out2 = jax.block_until_ready(
        discriminator_forward(x2, padded, tile_batch=128))
    ref2 = reference_forward(x2, params)
    assert out2.shape == (batch2, 1)
    assert jnp.allclose(out2, ref2, atol=1e-4, rtol=1e-4)

    # Default (large) tile_batch with a batch that triggers the ">= 2 tiles"
    # split so both v7x TensorCores would get work.
    batch3 = 512
    x3 = jax.random.normal(k_x3, (batch3, d_input_dim), dtype=jnp.float32)
    out3 = jax.block_until_ready(discriminator_forward(x3, padded))
    ref3 = reference_forward(x3, params)
    assert out3.shape == (batch3, 1)
    assert jnp.allclose(out3, ref3, atol=1e-4, rtol=1e-4)

    print("KERNEL_OK")
</pallas_src>

<mosaic_0001>
module attributes {stable_mosaic.version = 11 : i64} {
  func.func @discriminator_kernel(%arg0: i32, %arg1: memref<16x128xf32, #tpu.memory_space<vmem>>, %arg2: memref<56x16xf32, #tpu.memory_space<vmem>>, %arg3: memref<56x1xf32, #tpu.memory_space<vmem>>, %arg4: memref<56x56xf32, #tpu.memory_space<vmem>>, %arg5: memref<56x1xf32, #tpu.memory_space<vmem>>, %arg6: memref<56x1xf32, #tpu.memory_space<vmem>>, %arg7: memref<1x1xf32, #tpu.memory_space<vmem>>, %arg8: memref<1x128xf32, #tpu.memory_space<vmem>>) attributes {dimension_semantics = [#tpu.dimension_semantics<parallel>], iteration_bounds = array<i64: 1>, scalar_prefetch = 0 : i64, scratch_operands = 0 : i64, tpu.core_type = #tpu.core_type<tc>, window_params = [{transform_indices = @transform_0, window_bounds = array<i64: 16, 128>}, {pipeline_mode = #tpu.pipeline_mode<synchronous>, transform_indices = @transform_1, window_bounds = array<i64: 56, 16>}, {pipeline_mode = #tpu.pipeline_mode<synchronous>, transform_indices = @transform_2, window_bounds = array<i64: 56, 1>}, {pipeline_mode = #tpu.pipeline_mode<synchronous>, transform_indices = @transform_3, window_bounds = array<i64: 56, 56>}, {pipeline_mode = #tpu.pipeline_mode<synchronous>, transform_indices = @transform_4, window_bounds = array<i64: 56, 1>}, {pipeline_mode = #tpu.pipeline_mode<synchronous>, transform_indices = @transform_5, window_bounds = array<i64: 56, 1>}, {pipeline_mode = #tpu.pipeline_mode<synchronous>, transform_indices = @transform_6, window_bounds = array<i64: 1, 1>}, {transform_indices = @transform_7, window_bounds = array<i64: 1, 128>}]} {
    %c0 = arith.constant 0 : index
    %c0_0 = arith.constant 0 : index
    %0 = vector.load %arg1[%c0, %c0_0] : memref<16x128xf32, #tpu.memory_space<vmem>>, vector<16x128xf32>
    %c0_1 = arith.constant 0 : index
    %c0_2 = arith.constant 0 : index
    %1 = vector.load %arg2[%c0_1, %c0_2] : memref<56x16xf32, #tpu.memory_space<vmem>>, vector<56x16xf32>
    %cst = arith.constant dense<0.000000e+00> : vector<56x128xf32>
    %2 = tpu.matmul %1, %0, %cst {dimension_numbers = #tpu.dot_dimension_numbers<[1], [0], [0], [1], [0, 0, 1, 1], [], []>} : vector<56x16xf32>, vector<16x128xf32>, vector<56x128xf32> -> vector<56x128xf32>
    %c0_3 = arith.constant 0 : index
    %c0_4 = arith.constant 0 : index
    %3 = vector.load %arg3[%c0_3, %c0_4] : memref<56x1xf32, #tpu.memory_space<vmem>>, vector<56x1xf32>
    %4 = vector.broadcast %3 : vector<56x1xf32> to vector<56x128xf32>
    %5 = arith.addf %2, %4 : vector<56x128xf32>
    %6 = math.tanh %5 : vector<56x128xf32>
    %c0_5 = arith.constant 0 : index
    %c0_6 = arith.constant 0 : index
    %7 = vector.load %arg4[%c0_5, %c0_6] : memref<56x56xf32, #tpu.memory_space<vmem>>, vector<56x56xf32>
    %cst_7 = arith.constant dense<0.000000e+00> : vector<56x128xf32>
    %8 = tpu.matmul %7, %6, %cst_7 {dimension_numbers = #tpu.dot_dimension_numbers<[1], [0], [0], [1], [0, 0, 1, 1], [], []>} : vector<56x56xf32>, vector<56x128xf32>, vector<56x128xf32> -> vector<56x128xf32>
    %c0_8 = arith.constant 0 : index
    %c0_9 = arith.constant 0 : index
    %9 = vector.load %arg5[%c0_8, %c0_9] : memref<56x1xf32, #tpu.memory_space<vmem>>, vector<56x1xf32>
    %10 = vector.broadcast %9 : vector<56x1xf32> to vector<56x128xf32>
    %11 = arith.addf %8, %10 : vector<56x128xf32>
    %12 = math.tanh %11 : vector<56x128xf32>
    %c0_10 = arith.constant 0 : index
    %c0_11 = arith.constant 0 : index
    %13 = vector.load %arg6[%c0_10, %c0_11] : memref<56x1xf32, #tpu.memory_space<vmem>>, vector<56x1xf32>
    %14 = vector.broadcast %13 : vector<56x1xf32> to vector<56x128xf32>
    %15 = arith.mulf %12, %14 : vector<56x128xf32>
    %cst_12 = arith.constant dense<0.000000e+00> : vector<128xf32>
    %16 = vector.multi_reduction <add>, %15, %cst_12 [0] : vector<56x128xf32> to vector<128xf32>
    %17 = vector.shape_cast %16 : vector<128xf32> to vector<1x128xf32>
    %c0_13 = arith.constant 0 : index
    %c0_14 = arith.constant 0 : index
    %18 = vector.load %arg7[%c0_13, %c0_14] : memref<1x1xf32, #tpu.memory_space<vmem>>, vector<1x1xf32>
    %19 = vector.broadcast %18 : vector<1x1xf32> to vector<1x128xf32>
    %20 = arith.addf %17, %19 : vector<1x128xf32>
    %c0_15 = arith.constant 0 : index
    %c0_16 = arith.constant 0 : index
    %21 = vector.load %arg8[%c0_15, %c0_16] : memref<1x128xf32, #tpu.memory_space<vmem>>, vector<1x128xf32>
    tpu.vector_store %arg8[%c0_15, %c0_16], %20 {strides = array<i32>} : memref<1x128xf32, #tpu.memory_space<vmem>>, vector<1x128xf32>,
    return
  }
  func.func @transform_0(%arg0: i32) -> (i32, i32) {
    %c0_i32 = arith.constant 0 : i32
    %c0_i32_0 = arith.constant 0 : i32
    return %c0_i32, %arg0 : i32, i32
  }
  func.func @transform_1(%arg0: i32) -> (i32, i32) {
    %c0_i32 = arith.constant 0 : i32
    %c0_i32_0 = arith.constant 0 : i32
    %c0_i32_1 = arith.constant 0 : i32
    return %c0_i32, %c0_i32_0 : i32, i32
  }
  func.func @transform_2(%arg0: i32) -> (i32, i32) {
    %c0_i32 = arith.constant 0 : i32
    %c0_i32_0 = arith.constant 0 : i32
    %c0_i32_1 = arith.constant 0 : i32
    return %c0_i32, %c0_i32_0 : i32, i32
  }
  func.func @transform_3(%arg0: i32) -> (i32, i32) {
    %c0_i32 = arith.constant 0 : i32
    %c0_i32_0 = arith.constant 0 : i32
    %c0_i32_1 = arith.constant 0 : i32
    return %c0_i32, %c0_i32_0 : i32, i32
  }
  func.func @transform_4(%arg0: i32) -> (i32, i32) {
    %c0_i32 = arith.constant 0 : i32
    %c0_i32_0 = arith.constant 0 : i32
    %c0_i32_1 = arith.constant 0 : i32
    return %c0_i32, %c0_i32_0 : i32, i32
  }
  func.func @transform_5(%arg0: i32) -> (i32, i32) {
    %c0_i32 = arith.constant 0 : i32
    %c0_i32_0 = arith.constant 0 : i32
    %c0_i32_1 = arith.constant 0 : i32
    return %c0_i32, %c0_i32_0 : i32, i32
  }
  func.func @transform_6(%arg0: i32) -> (i32, i32) {
    %c0_i32 = arith.constant 0 : i32
    %c0_i32_0 = arith.constant 0 : i32
    %c0_i32_1 = arith.constant 0 : i32
    return %c0_i32, %c0_i32_0 : i32, i32
  }
  func.func @transform_7(%arg0: i32) -> (i32, i32) {
    %c0_i32 = arith.constant 0 : i32
    %c0_i32_0 = arith.constant 0 : i32
    return %c0_i32, %arg0 : i32, i32
  }
}

</mosaic_0001>

<llo_original>
// kernel: tpu_custom_call.1
$region0: #{tpu_custom_call.1}
  #allocation0 [shape = 'u32[]', space=smem, size = 0x4, offset = 0x4, fixed_abs, tag = 'smem constant byte address 0x4 - core index']
  #allocation1 [shape = 'u32[144,128]{1,0:T(1,128)}', space=vmem, size = 0x12000, scoped, tag = 'internal scratch']
  #allocation2 [shape = 'f32[1,1]{1,0:T(1,128)S(1)}', space=vmem, size = 0x200, scoped, tag = 'scoped memory for tpu_custom_call.1']
  %s0 = inlined_call_operand.vmem [shape: f32[16,128], index: 0, kind: input, shape index: {}]
  %s1 = inlined_call_operand.vmem [shape: f32[56,16], index: 1, kind: input, shape index: {}]
  %s2 = inlined_call_operand.vmem [shape: f32[56,1], index: 2, kind: input, shape index: {}]
  %s3 = inlined_call_operand.vmem [shape: f32[56,56], index: 3, kind: input, shape index: {}]
  %s4 = inlined_call_operand.vmem [shape: f32[56,1], index: 4, kind: input, shape index: {}]
  %s5 = inlined_call_operand.vmem [shape: f32[56,1], index: 5, kind: input, shape index: {}]
  %s6 = inlined_call_operand.<no memory space> [shape: f32[1,1], index: 6, kind: input, shape index: {}]
  %s7 = inlined_call_operand.hbm [shape: f32[1,128], index: 7, kind: output, shape index: {}]
  %s8 = sld [smem:[#allocation0]]
  $region38: #{tpu_custom_call.1} parent=0
    _
  %s10 = ssub.s32 1, %s8
  %s11 = scalar_select 0, %s10, %s8
  %v12 = vstv %s6
  %13 = vst [vmem:[#allocation2] sm:$0x1] %v12
  $region1: #{tpu_custom_call.1} parent=0
    #allocation3 [shape = 'u8[512]{0}', space=vmem, size = 0x400, scoped, tag = 'output window, operand 0, single buffered']
    #allocation4 [shape = 's32[1]{0}', space=sflag, size = 0x4, scoped, tag = 'scoped memory for tpu_custom_call.1']
    %14 = vsyncpa [#allocation4], 0
    // Predicated region
    $region2: #{tpu_custom_call.1} parent=1 // pred_check
      _
    $region3: #{tpu_custom_call.1} parent=1 // pred_check_branch
      %16 = sbr.rel (0) target = $region5
    $region4: #{tpu_custom_call.1} parent=1 // pred_region
      _
    $region5: #{tpu_custom_call.1} parent=1 // pred_fallthru
      _
    // Predicated region
    $region6: #{tpu_custom_call.1} parent=1 // pred_check
      _
    $region7: #{tpu_custom_call.1} parent=1 // pred_check_branch
      %18 = sbr.rel (0) target = $region9
    $region8: #{tpu_custom_call.1} parent=1 // pred_region
      _
    $region9: #{tpu_custom_call.1} parent=1 // pred_fallthru
      _
    // Predicated region
    $region10: #{tpu_custom_call.1} parent=1 // pred_check
      _
    $region11: #{tpu_custom_call.1} parent=1 // pred_check_branch
      %20 = sbr.rel (0) target = $region13
    $region12: #{tpu_custom_call.1} parent=1 // pred_region
      _
    $region13: #{tpu_custom_call.1} parent=1 // pred_fallthru
      _
    // Predicated region
    $region14: #{tpu_custom_call.1} parent=1 // pred_check
      _
    $region15: #{tpu_custom_call.1} parent=1 // pred_check_branch
      %22 = sbr.rel (0) target = $region17
    $region16: #{tpu_custom_call.1} parent=1 // pred_region
      _
    $region17: #{tpu_custom_call.1} parent=1 // pred_fallthru
      _
    // Predicated region
    $region18: #{tpu_custom_call.1} parent=1 // pred_check
      _
    $region19: #{tpu_custom_call.1} parent=1 // pred_check_branch
      %24 = sbr.rel (0) target = $region21
    $region20: #{tpu_custom_call.1} parent=1 // pred_region
      _
    $region21: #{tpu_custom_call.1} parent=1 // pred_fallthru
      _
    // Predicated region
    $region22: #{tpu_custom_call.1} parent=1 // pred_check
      _
    $region23: #{tpu_custom_call.1} parent=1 // pred_check_branch
      %26 = sbr.rel (0) target = $region25
    $region24: #{tpu_custom_call.1} parent=1 // pred_region
      _
    $region25: #{tpu_custom_call.1} parent=1 // pred_fallthru
      _
    // Predicated region
    $region26: #{tpu_custom_call.1} parent=1 // pred_check
      _
    $region27: #{tpu_custom_call.1} parent=1 // pred_check_branch
      %28 = sbr.rel (0) target = $region29
    $region28: #{tpu_custom_call.1} parent=1 // pred_region
      _
    $region29: #{tpu_custom_call.1} parent=1 // pred_fallthru
      _
    %v29 = vld [vmem:[%s0] sm:$0xff]
    %v30 = vld [vmem:[%s0 + $0x8] sm:$0xff]
    %v31 = vld [vmem:[%s1] sm:$0xff]
    %v32 = vld [vmem:[%s1 + $0x8] sm:$0xff]
    %v33 = vld [vmem:[%s1 + $0x10] sm:$0xff]
    %v34 = vld [vmem:[%s1 + $0x18] sm:$0xff]
    %v35 = vld [vmem:[%s1 + $0x20] sm:$0xff]
    %v36 = vld [vmem:[%s1 + $0x28] sm:$0xff]
    %v37 = vld [vmem:[%s1 + $0x30] sm:$0xff]
    %v38 = vld [vmem:[%s2] sm:$0xff]
    %v39 = vld [vmem:[%s2 + $0x8] sm:$0xff]
    %v40 = vld [vmem:[%s2 + $0x10] sm:$0xff]
    %v41 = vld [vmem:[%s2 + $0x18] sm:$0xff]
    %v42 = vld [vmem:[%s2 + $0x20] sm:$0xff]
    %v43 = vld [vmem:[%s2 + $0x28] sm:$0xff]
    %v44 = vld [vmem:[%s2 + $0x30] sm:$0xff]
    %46 = vset.pattern.permute.xlu0 0
    %47 = vperm.xlu0 %46, %v38
    %v48 = vpop.permute.xlu0 %47
    %51 = vset.pattern.permute.xlu0 0
    %52 = vperm.xlu0 %51, %v39
    %v53 = vpop.permute.xlu0 %52
    %56 = vset.pattern.permute.xlu0 0
    %57 = vperm.xlu0 %56, %v40
    %v58 = vpop.permute.xlu0 %57
    %61 = vset.pattern.permute.xlu0 0
    %62 = vperm.xlu0 %61, %v41
    %v63 = vpop.permute.xlu0 %62
    %66 = vset.pattern.permute.xlu0 0
    %67 = vperm.xlu0 %66, %v42
    %v68 = vpop.permute.xlu0 %67
    %71 = vset.pattern.permute.xlu0 0
    %72 = vperm.xlu0 %71, %v43
    %v73 = vpop.permute.xlu0 %72
    %76 = vset.pattern.permute.xlu0 0
    %77 = vperm.xlu0 %76, %v44
    %v78 = vpop.permute.xlu0 %77
    %vm80 = vcmask 130048
    %v82 = vsel %vm80, %v31, 0
    %v85 = vsel %vm80, %v32, 0
    %v88 = vsel %vm80, %v33, 0
    %v91 = vsel %vm80, %v34, 0
    %v94 = vsel %vm80, %v35, 0
    %v97 = vsel %vm80, %v36, 0
    %v100 = vsel %vm80, %v37, 0
    %102 = vmatprep.subr.mxu0 0.0
    %103 = vmatpush1.msra.mxu0 %v29
    %104 = vmatprep.subr.mxu0 0.0
    %105 = vmatpush1.msra.mxu0 %v30
    %106 = vmatprep.subr.mxu0 0.0
    %107 = vmatpush1.msra.mxu0 0.0
    %108 = vmatprep.subr.mxu0 0.0
    %109 = vmatpush1.msra.mxu0 0.0
    %110 = vmatprep.subr.mxu0 0.0
    %111 = vmatpush1.msra.mxu0 0.0
    %112 = vmatprep.subr.mxu0 0.0
    %113 = vmatpush1.msra.mxu0 0.0
    %114 = vmatprep.subr.mxu0 0.0
    %115 = vmatpush1.msra.mxu0 0.0
    %116 = vmatprep.subr.mxu0 0.0
    %117 = vmatpush1.msra.mxu0 0.0
    %118 = vmatprep.subr.mxu0 0.0
    %119 = vmatpush1.msra.mxu0 0.0
    %120 = vmatprep.subr.mxu0 0.0
    %121 = vmatpush1.msra.mxu0 0.0
    %122 = vmatprep.subr.mxu0 0.0
    %123 = vmatpush1.msra.mxu0 0.0
    %124 = vmatprep.subr.mxu0 0.0
    %125 = vmatpush1.msra.mxu0 0.0
    %126 = vmatprep.subr.mxu0 0.0
    %127 = vmatpush1.msra.mxu0 0.0
    %128 = vmatprep.subr.mxu0 0.0
    %129 = vmatpush1.msra.mxu0 0.0
    %130 = vmatprep.subr.mxu0 0.0
    %131 = vmatpush1.msra.mxu0 0.0
    %132 = vmatprep.subr.mxu0 0.0
    %133 = vmatpush1.msra.mxu0 0.0
    %134 = vmatprep.subr.mxu0 0.0
    %135 = vmatpush1.msra.mxu0 0.0
    %136 = vmatprep.subr.mxu0 0.0
    %137 = vmatpush1.msra.mxu0 0.0
    %138 = vmatprep.subr.mxu0 0.0
    %139 = vmatpush1.msra.mxu0 0.0
    %140 = vmatprep.subr.mxu0 0.0
    %141 = vmatpush1.msra.mxu0 0.0
    %142 = vmatprep.subr.mxu0 0.0
    %143 = vmatpush1.msra.mxu0 0.0
    %144 = vmatprep.subr.mxu0 0.0
    %145 = vmatpush1.msra.mxu0 0.0
    %146 = vmatprep.subr.mxu0 0.0
    %147 = vmatpush1.msra.mxu0 0.0
    %148 = vmatprep.subr.mxu0 0.0
    %149 = vmatpush1.msra.mxu0 0.0
    %150 = vmatprep.subr.mxu0 0.0
    %151 = vmatpush1.msra.mxu0 0.0
    %152 = vmatprep.subr.mxu0 0.0
    %153 = vmatpush1.msra.mxu0 0.0
    %154 = vmatprep.subr.mxu0 0.0
    %155 = vmatpush1.msra.mxu0 0.0
    %156 = vmatprep.subr.mxu0 0.0
    %157 = vmatpush1.msra.mxu0 0.0
    %158 = vmatprep.subr.mxu0 0.0
    %159 = vmatpush1.msra.mxu0 0.0
    %160 = vmatprep.subr.mxu0 0.0
    %161 = vmatpush1.msra.mxu0 0.0
    %162 = vmatprep.subr.mxu0 0.0
    %163 = vmatpush1.msra.mxu0 0.0
    %164 = vmatprep.subr.mxu0 0.0
    %165 = vmatpush1.msra.mxu0 0.0
    %166 = vmatprep.mubr.f32.mxu0 0.0
    %167 = vmatmul.mubr.f32.gmra.mrb[0].mxu0 %v82
    %v168 = vpop.f32.mrb[0].mxu0
    %v169 = vadd.f32 %v48, %v168
    %v170 = vpop.f32.mrb[0].mxu0
    %171 = vmatprep.mubr.f32.mxu0 0.0
    %172 = vmatmul.mubr.f32.gmra.mrb[0].mxu0 %v85
    %v173 = vpop.f32.mrb[0].mxu0
    %v174 = vadd.f32 %v53, %v173
    %v175 = vpop.f32.mrb[0].mxu0
    %176 = vmatprep.mubr.f32.mxu0 0.0
    %177 = vmatmul.mubr.f32.gmra.mrb[0].mxu0 %v88
    %v178 = vpop.f32.mrb[0].mxu0
    %v179 = vadd.f32 %v58, %v178
    %v180 = vpop.f32.mrb[0].mxu0
    %181 = vmatprep.mubr.f32.mxu0 0.0
    %182 = vmatmul.mubr.f32.gmra.mrb[0].mxu0 %v91
    %v183 = vpop.f32.mrb[0].mxu0
    %v184 = vadd.f32 %v63, %v183
    %v185 = vpop.f32.mrb[0].mxu0
    %186 = vmatprep.mubr.f32.mxu0 0.0
    %187 = vmatmul.mubr.f32.gmra.mrb[0].mxu0 %v94
    %v188 = vpop.f32.mrb[0].mxu0
    %v189 = vadd.f32 %v68, %v188
    %v190 = vpop.f32.mrb[0].mxu0
    %191 = vmatprep.mubr.f32.mxu0 0.0
    %192 = vmatmul.mubr.f32.gmra.mrb[0].mxu0 %v97
    %v193 = vpop.f32.mrb[0].mxu0
    %v194 = vadd.f32 %v73, %v193
    %v195 = vpop.f32.mrb[0].mxu0
    %196 = vmatprep.mubr.f32.mxu0 0.0
    %197 = vmatmul.mubr.f32.gmra.mrb[0].mxu0 %v100
    %v198 = vpop.f32.mrb[0].mxu0
    %v199 = vadd.f32 %v78, %v198
    %v200 = vpop.f32.mrb[0].mxu0
    %201 = vdwg.mxu0
    %v202 = vtanh.pop %v169
    %v203 = vtanh.pop %v174
    %v204 = vtanh.pop %v179
    %v205 = vtanh.pop %v184
    %v206 = vtanh.pop %v189
    %v207 = vtanh.pop %v194
    %v208 = vtanh.pop %v199
    %v209 = vld [vmem:[%s3] sm:$0xff]
    %v210 = vld [vmem:[%s3 + $0x8] sm:$0xff]
    %v211 = vld [vmem:[%s3 + $0x10] sm:$0xff]
    %v212 = vld [vmem:[%s3 + $0x18] sm:$0xff]
    %v213 = vld [vmem:[%s3 + $0x20] sm:$0xff]
    %v214 = vld [vmem:[%s3 + $0x28] sm:$0xff]
    %v215 = vld [vmem:[%s3 + $0x30] sm:$0xff]
    %v216 = vld [vmem:[%s4] sm:$0xff]
    %v217 = vld [vmem:[%s4 + $0x8] sm:$0xff]
    %v218 = vld [vmem:[%s4 + $0x10] sm:$0xff]
    %v219 = vld [vmem:[%s4 + $0x18] sm:$0xff]
    %v220 = vld [vmem:[%s4 + $0x20] sm:$0xff]
    %v221 = vld [vmem:[%s4 + $0x28] sm:$0xff]
    %v222 = vld [vmem:[%s4 + $0x30] sm:$0xff]
    %224 = vset.pattern.permute.xlu0 0
    %225 = vperm.xlu0 %224, %v216
    %v226 = vpop.permute.xlu0 %225
    %229 = vset.pattern.permute.xlu0 0
    %230 = vperm.xlu0 %229, %v217
    %v231 = vpop.permute.xlu0 %230
    %234 = vset.pattern.permute.xlu0 0
    %235 = vperm.xlu0 %234, %v218
    %v236 = vpop.permute.xlu0 %235
    %239 = vset.pattern.permute.xlu0 0
    %240 = vperm.xlu0 %239, %v219
    %v241 = vpop.permute.xlu0 %240
    %244 = vset.pattern.permute.xlu0 0
    %245 = vperm.xlu0 %244, %v220
    %v246 = vpop.permute.xlu0 %245
    %249 = vset.pattern.permute.xlu0 0
    %250 = vperm.xlu0 %249, %v221
    %v251 = vpop.permute.xlu0 %250
    %254 = vset.pattern.permute.xlu0 0
    %255 = vperm.xlu0 %254, %v222
    %v256 = vpop.permute.xlu0 %255
    %vm258 = vcmask 457728
    %v260 = vsel %vm258, %v209, 0
    %v263 = vsel %vm258, %v210, 0
    %v266 = vsel %vm258, %v211, 0
    %v269 = vsel %vm258, %v212, 0
    %v272 = vsel %vm258, %v213, 0
    %v275 = vsel %vm258, %v214, 0
    %v278 = vsel %vm258, %v215, 0
    %280 = vmatprep.subr.mxu0 0.0
    %281 = vmatpush1.msra.mxu0 %v202
    %282 = vmatprep.subr.mxu0 0.0
    %283 = vmatpush1.msra.mxu0 %v203
    %284 = vmatprep.subr.mxu0 0.0
    %285 = vmatpush1.msra.mxu0 %v204
    %286 = vmatprep.subr.mxu0 0.0
    %287 = vmatpush1.msra.mxu0 %v205
    %288 = vmatprep.subr.mxu0 0.0
    %289 = vmatpush1.msra.mxu0 %v206
    %290 = vmatprep.subr.mxu0 0.0
    %291 = vmatpush1.msra.mxu0 %v207
    %292 = vmatprep.subr.mxu0 0.0
    %293 = vmatpush1.msra.mxu0 %v208
    %294 = vmatprep.subr.mxu0 0.0
    %295 = vmatpush1.msra.mxu0 0.0
    %296 = vmatprep.subr.mxu0 0.0
    %297 = vmatpush1.msra.mxu0 0.0
    %298 = vmatprep.subr.mxu0 0.0
    %299 = vmatpush1.msra.mxu0 0.0
    %300 = vmatprep.subr.mxu0 0.0
    %301 = vmatpush1.msra.mxu0 0.0
    %302 = vmatprep.subr.mxu0 0.0
    %303 = vmatpush1.msra.mxu0 0.0
    %304 = vmatprep.subr.mxu0 0.0
    %305 = vmatpush1.msra.mxu0 0.0
    %306 = vmatprep.subr.mxu0 0.0
    %307 = vmatpush1.msra.mxu0 0.0
    %308 = vmatprep.subr.mxu0 0.0
    %309 = vmatpush1.msra.mxu0 0.0
    %310 = vmatprep.subr.mxu0 0.0
    %311 = vmatpush1.msra.mxu0 0.0
    %312 = vmatprep.subr.mxu0 0.0
    %313 = vmatpush1.msra.mxu0 0.0
    %314 = vmatprep.subr.mxu0 0.0
    %315 = vmatpush1.msra.mxu0 0.0
    %316 = vmatprep.subr.mxu0 0.0
    %317 = vmatpush1.msra.mxu0 0.0
    %318 = vmatprep.subr.mxu0 0.0
    %319 = vmatpush1.msra.mxu0 0.0
    %320 = vmatprep.subr.mxu0 0.0
    %321 = vmatpush1.msra.mxu0 0.0
    %322 = vmatprep.subr.mxu0 0.0
    %323 = vmatpush1.msra.mxu0 0.0
    %324 = vmatprep.subr.mxu0 0.0
    %325 = vmatpush1.msra.mxu0 0.0
    %326 = vmatprep.subr.mxu0 0.0
    %327 = vmatpush1.msra.mxu0 0.0
    %328 = vmatprep.subr.mxu0 0.0
    %329 = vmatpush1.msra.mxu0 0.0
    %330 = vmatprep.subr.mxu0 0.0
    %331 = vmatpush1.msra.mxu0 0.0
    %332 = vmatprep.subr.mxu0 0.0
    %333 = vmatpush1.msra.mxu0 0.0
    %334 = vmatprep.subr.mxu0 0.0
    %335 = vmatpush1.msra.mxu0 0.0
    %336 = vmatprep.subr.mxu0 0.0
    %337 = vmatpush1.msra.mxu0 0.0
    %338 = vmatprep.subr.mxu0 0.0
    %339 = vmatpush1.msra.mxu0 0.0
    %340 = vmatprep.subr.mxu0 0.0
    %341 = vmatpush1.msra.mxu0 0.0
    %342 = vmatprep.subr.mxu0 0.0
    %343 = vmatpush1.msra.mxu0 0.0
    %344 = vmatprep.mubr.f32.mxu0 0.0
    %345 = vmatmul.mubr.f32.gmra.mrb[0].mxu0 %v260
    %v346 = vpop.f32.mrb[0].mxu0
    %v347 = vadd.f32 %v226, %v346
    %v348 = vpop.f32.mrb[0].mxu0
    %349 = vmatprep.mubr.f32.mxu0 0.0
    %350 = vmatmul.mubr.f32.gmra.mrb[0].mxu0 %v263
    %v351 = vpop.f32.mrb[0].mxu0
    %v352 = vadd.f32 %v231, %v351
    %v353 = vpop.f32.mrb[0].mxu0
    %354 = vmatprep.mubr.f32.mxu0 0.0
    %355 = vmatmul.mubr.f32.gmra.mrb[0].mxu0 %v266
    %v356 = vpop.f32.mrb[0].mxu0
    %v357 = vadd.f32 %v236, %v356
    %v358 = vpop.f32.mrb[0].mxu0
    %359 = vmatprep.mubr.f32.mxu0 0.0
    %360 = vmatmul.mubr.f32.gmra.mrb[0].mxu0 %v269
    %v361 = vpop.f32.mrb[0].mxu0
    %v362 = vadd.f32 %v241, %v361
    %v363 = vpop.f32.mrb[0].mxu0
    %364 = vmatprep.mubr.f32.mxu0 0.0
    %365 = vmatmul.mubr.f32.gmra.mrb[0].mxu0 %v272
    %v366 = vpop.f32.mrb[0].mxu0
    %v367 = vadd.f32 %v246, %v366
    %v368 = vpop.f32.mrb[0].mxu0
    %369 = vmatprep.mubr.f32.mxu0 0.0
    %370 = vmatmul.mubr.f32.gmra.mrb[0].mxu0 %v275
    %v371 = vpop.f32.mrb[0].mxu0
    %v372 = vadd.f32 %v251, %v371
    %v373 = vpop.f32.mrb[0].mxu0
    %374 = vmatprep.mubr.f32.mxu0 0.0
    %375 = vmatmul.mubr.f32.gmra.mrb[0].mxu0 %v278
    %v376 = vpop.f32.mrb[0].mxu0
    %v377 = vadd.f32 %v256, %v376
    %v378 = vpop.f32.mrb[0].mxu0
    %379 = vdwg.mxu0
    %v380 = vtanh.pop %v347
    %v381 = vtanh.pop %v352
    %v382 = vtanh.pop %v357
    %v383 = vtanh.pop %v362
    %v384 = vtanh.pop %v367
    %v385 = vtanh.pop %v372
    %v386 = vtanh.pop %v377
    %v387 = vld [vmem:[%s5] sm:$0xff]
    %v388 = vld [vmem:[%s5 + $0x8] sm:$0xff]
    %v389 = vld [vmem:[%s5 + $0x10] sm:$0xff]
    %v390 = vld [vmem:[%s5 + $0x18] sm:$0xff]
    %v391 = vld [vmem:[%s5 + $0x20] sm:$0xff]
    %v392 = vld [vmem:[%s5 + $0x28] sm:$0xff]
    %v393 = vld [vmem:[%s5 + $0x30] sm:$0xff]
    %395 = vset.pattern.permute.xlu0 0
    %396 = vperm.xlu0 %395, %v387
    %v397 = vpop.permute.xlu0 %396
    %400 = vset.pattern.permute.xlu0 0
    %401 = vperm.xlu0 %400, %v388
    %v402 = vpop.permute.xlu0 %401
    %405 = vset.pattern.permute.xlu0 0
    %406 = vperm.xlu0 %405, %v389
    %v407 = vpop.permute.xlu0 %406
    %410 = vset.pattern.permute.xlu0 0
    %411 = vperm.xlu0 %410, %v390
    %v412 = vpop.permute.xlu0 %411
    %415 = vset.pattern.permute.xlu0 0
    %416 = vperm.xlu0 %415, %v391
    %v417 = vpop.permute.xlu0 %416
    %420 = vset.pattern.permute.xlu0 0
    %421 = vperm.xlu0 %420, %v392
    %v422 = vpop.permute.xlu0 %421
    %425 = vset.pattern.permute.xlu0 0
    %426 = vperm.xlu0 %425, %v393
    %v427 = vpop.permute.xlu0 %426
    %v429 = vmul.f32 %v380, %v397
    %v430 = vmul.f32 %v381, %v402
    %v431 = vmul.f32 %v382, %v407
    %v432 = vmul.f32 %v383, %v412
    %v433 = vmul.f32 %v384, %v417
    %v434 = vmul.f32 %v385, %v422
    %v435 = vmul.f32 %v386, %v427
    %v436 = vadd.f32 %v429, %v430
    %v437 = vadd.f32 %v436, %v431
    %v438 = vadd.f32 %v437, %v432
    %v439 = vadd.f32 %v438, %v433
    %v440 = vadd.f32 %v439, %v434
    %v441 = vadd.f32 %v440, %v435
    %v442 = vrot.slane %v441, 4
    %v443 = vadd.f32 %v441, %v442
    %v444 = vrot.slane %v443, 2
    %v445 = vadd.f32 %v443, %v444
    %v446 = vrot.slane %v445, 1
    %v447 = vadd.f32 %v445, %v446
    %v448 = vld [vmem:[#allocation2] sm:$0x1]
    %450 = vset.pattern.permute.xlu0 0
    %451 = vperm.xlu0 %450, %v448
    %v452 = vpop.permute.xlu0 %451
    %v454 = vlaneseq
    %v455 = vshrl.u32 %v454, 7
    %v456 = vsub.s32 0, %v455
    %v457 = vrot.slane %v452, %v456
    %v458 = vadd.f32 %v447, %v457
    %459 = vst [vmem:[#allocation3] sm:$0x1] %v458
    // Predicated region
    $region30: #{tpu_custom_call.1} parent=1 // pred_check
      _
    $region31: #{tpu_custom_call.1} parent=1 // pred_check_branch
      %461 = sbr.rel (0) target = $region33
    $region32: #{tpu_custom_call.1} parent=1 // pred_region
      %s463 = ssub.s32 16, 16
      %464 = vsyncadd [#allocation4], %s463
      %s466 = sshll.u32 [#allocation3], 4
      %s467 = int_to_ptr.vmem [resolvable:$true] %s466
      %469 = dma.vmem_to_hbm [thread:$0]  %s467, 16, %s7, [#allocation4]
    $region33: #{tpu_custom_call.1} parent=1 // pred_fallthru
      _
    // Predicated region
    $region34: #{tpu_custom_call.1} parent=1 // pred_check
      _
    $region35: #{tpu_custom_call.1} parent=1 // pred_check_branch
      %471 = sbr.rel (0) target = $region37
    $region36: #{tpu_custom_call.1} parent=1 // pred_region
      %472 = dma.done [#allocation4], 16
    $region37: #{tpu_custom_call.1} parent=1 // pred_fallthru
      _
    %473 = vsyncpa [#allocation4], 1

</llo_original>
